<compile_context>
chip_gen: v7x
topology: tpu7x:2x2x1
jax: 0.10.0
libtpu: 0.0.40
codegen_flags: <defaults>
</compile_context>

<pallas_src>
import functools
import math

import numpy as np
import jax
import jax.numpy as jnp
from jax.experimental import pallas as pl
from jax.experimental.pallas import tpu as pltpu

EPS = 1e-6


def _round_up(a: int, b: int) -> int:
    return (a + b - 1) // b * b


def _gem_kernel(p_ref, x_ref, o_ref, s_ref, *, hw, hw_pad, eps):
    """One row-block of GeM pooling.

    p_ref : (1,)          SMEM  learnable exponent p
    x_ref : (R, hw_pad)   VMEM  rows = (batch, channel) pairs, lanes = spatial
    o_ref : (R, 1)        VMEM  pooled output for this row block
    s_ref : (R, 1)        VMEM  f32 scratch: row sums of clamp(x, eps)^p
    """
    p = p_ref[0]
    x = jnp.maximum(x_ref[...], jnp.float32(eps))          # clamp(min=eps)

    if hw_pad != hw:
        # H*W not a multiple of 128: mask out the zero-padded lanes.
        lane = jax.lax.broadcasted_iota(jnp.int32, x.shape, dimension=1)
        valid = lane < hw
    else:
        valid = None

    def _row_sum(xp):
        if valid is not None:
            xp = jnp.where(valid, xp, jnp.float32(0.0))
        return jnp.sum(xp, axis=-1, keepdims=True)          # (R, 1)

    # EUP mitigation: the standard GeM init (p == 3) skips the two
    # transcendentals per element and runs a pure-VPU multiply chain.
    is_cube = p == jnp.float32(3.0)

    @pl.when(is_cube)
    def _():
        s_ref[...] = _row_sum(x * x * x)

    @pl.when(jnp.logical_not(is_cube))
    def _():
        # x ** p with a runtime scalar exponent (x > 0): exp(p * log x), f32.
        s_ref[...] = _row_sum(jnp.exp(jnp.log(x) * p))

    # mean^(1/p) with 1/HW folded into log space; per-row cost only.
    inv_p = 1.0 / p
    log_hw = jnp.float32(math.log(hw))
    o_ref[...] = jnp.exp((jnp.log(s_ref[...]) - log_hw) * inv_p)


def gem_forward(x, p, eps=EPS):
    """x: (B, C, H, W) float32, p: (1,) float32 -> (B, C, 1, 1) float32."""
    B, C, H, W = x.shape
    hw = H * W
    hw_pad = _round_up(hw, 128)                  # lane-aligned reduction axis
    rows = B * C

    # Row-block size: ~4 MiB per input block so the double-buffered pipeline
    # (2 x block + tiny output/scratch) stays inside every generation's
    # default scoped-VMEM budget and well under v7x's 64 MiB physical VMEM,
    # while being wide enough (>=512 rows at H*W=256) to sit near the HBM
    # roofline.
    target_block_bytes = 4 * 1024 * 1024
    r_cap = max(8, (target_block_bytes // (hw_pad * 4)) // 8 * 8)
    block_r = min(r_cap, _round_up(rows, 8))
    rows_pad = _round_up(rows, block_r)
    num_blocks = rows_pad // block_r

    x_flat = x.reshape(rows, hw).astype(jnp.float32)
    if rows_pad != rows or hw_pad != hw:
        # Zero padding is harmless: padded rows are sliced off below and
        # padded lanes are masked inside the kernel.
        x_flat = jnp.pad(x_flat, ((0, rows_pad - rows), (0, hw_pad - hw)))

    kernel = functools.partial(_gem_kernel, hw=hw, hw_pad=hw_pad,
                               eps=float(eps))

    out = pl.pallas_call(
        kernel,
        out_shape=jax.ShapeDtypeStruct((rows_pad, 1), jnp.float32),
        grid_spec=pltpu.PrefetchScalarGridSpec(
            num_scalar_prefetch=0,
            grid=(num_blocks,),
            in_specs=[
                pl.BlockSpec(memory_space=pltpu.MemorySpace.SMEM),  # p scalar
                pl.BlockSpec((block_r, hw_pad), lambda i: (i, 0)),  # x tile
            ],
            out_specs=pl.BlockSpec((block_r, 1), lambda i: (i, 0)),
            scratch_shapes=[pltpu.VMEM((block_r, 1), jnp.float32)],
        ),
        # Row blocks are fully independent -> shard the grid across both
        # TensorCores on v7x; no-op on single-TC v5e/v6e.
        compiler_params=pltpu.CompilerParams(
            dimension_semantics=("parallel",)),
    )(p.astype(jnp.float32), x_flat)

    return out[:rows].reshape(B, C, 1, 1)


# ---------------- pure-JAX reference (sanity check) ----------------
def ref_gem(x, p, eps=EPS):
    xc = jnp.maximum(x, eps)
    pooled = jnp.mean(xc ** p[0], axis=(-2, -1), keepdims=True)
    return pooled ** (1.0 / p[0])


if __name__ == "__main__":
    key = jax.random.PRNGKey(0)
    B, C, H, W = 2, 4, 16, 16
    x = jax.random.normal(key, (B, C, H, W), jnp.float32)

    gem_jit = jax.jit(gem_forward)

    # p == 3 (standard GeM init): exercises the transcendental-free fast path.
    p3 = jnp.ones((1,), jnp.float32) * 3.0
    out3 = jax.block_until_ready(gem_jit(x, p3))
    np.testing.assert_allclose(np.asarray(out3), np.asarray(ref_gem(x, p3)),
                               rtol=1e-4, atol=1e-5)

    # Non-integer p: exercises the generic exp(p * log x) path.
    pf = jnp.ones((1,), jnp.float32) * 2.7
    outf = jax.block_until_ready(gem_jit(x, pf))
    np.testing.assert_allclose(np.asarray(outf), np.asarray(ref_gem(x, pf)),
                               rtol=1e-4, atol=1e-5)

    print("KERNEL_OK")
</pallas_src>

<mosaic_0001>
module attributes {stable_mosaic.version = 11 : i64} {
  func.func @_gem_kernel(%arg0: i32, %arg1: memref<1xf32, #tpu.memory_space<smem>>, %arg2: memref<8x256xf32, #tpu.memory_space<vmem>>, %arg3: memref<8x1xf32, #tpu.memory_space<vmem>>, %arg4: memref<8x1xf32, #tpu.memory_space<vmem>>) attributes {dimension_semantics = [#tpu.dimension_semantics<parallel>], iteration_bounds = array<i64: 1>, scalar_prefetch = 0 : i64, scratch_operands = 1 : i64, tpu.core_type = #tpu.core_type<tc>, window_params = [{transform_indices = @transform_0, window_bounds = array<i64: 1>}, {transform_indices = @transform_1, window_bounds = array<i64: 8, 256>}, {transform_indices = @transform_2, window_bounds = array<i64: 8, 1>}]} {
    %c0 = arith.constant 0 : index
    %0 = memref.load %arg1[%c0] : memref<1xf32, #tpu.memory_space<smem>>
    %c0_0 = arith.constant 0 : index
    %c0_1 = arith.constant 0 : index
    %1 = vector.load %arg2[%c0_0, %c0_1] : memref<8x256xf32, #tpu.memory_space<vmem>>, vector<8x256xf32>
    %cst = arith.constant 9.99999997E-7 : f32
    %2 = vector.broadcast %cst : f32 to vector<8x256xf32>
    %3 = arith.maximumf %1, %2 : vector<8x256xf32>
    %cst_2 = arith.constant 3.000000e+00 : f32
    %4 = arith.cmpf oeq, %0, %cst_2 : f32
    %5 = arith.extui %4 : i1 to i32
    %c0_i32 = arith.constant 0 : i32
    %6 = arith.cmpi ne, %5, %c0_i32 : i32
    scf.if %6 {
      %19 = arith.mulf %3, %3 : vector<8x256xf32>
      %20 = arith.mulf %19, %3 : vector<8x256xf32>
      %cst_10 = arith.constant dense<0.000000e+00> : vector<8xf32>
      %21 = vector.multi_reduction <add>, %20, %cst_10 [1] : vector<8x256xf32> to vector<8xf32>
      %22 = vector.shape_cast %21 : vector<8xf32> to vector<8x1xf32>
      %c0_11 = arith.constant 0 : index
      %c0_12 = arith.constant 0 : index
      %23 = vector.load %arg4[%c0_11, %c0_12] : memref<8x1xf32, #tpu.memory_space<vmem>>, vector<8x1xf32>
      tpu.vector_store %arg4[%c0_11, %c0_12], %22 {strides = array<i32>} : memref<8x1xf32, #tpu.memory_space<vmem>>, vector<8x1xf32>,
    } else {
    }
    %true = arith.constant true
    %7 = arith.xori %4, %true : i1
    %8 = arith.extui %7 : i1 to i32
    %c0_i32_3 = arith.constant 0 : i32
    %9 = arith.cmpi ne, %8, %c0_i32_3 : i32
    scf.if %9 {
      %19 = math.log %3 : vector<8x256xf32>
      %20 = vector.broadcast %0 : f32 to vector<8x256xf32>
      %21 = arith.mulf %19, %20 : vector<8x256xf32>
      %22 = math.exp %21 : vector<8x256xf32>
      %cst_10 = arith.constant dense<0.000000e+00> : vector<8xf32>
      %23 = vector.multi_reduction <add>, %22, %cst_10 [1] : vector<8x256xf32> to vector<8xf32>
      %24 = vector.shape_cast %23 : vector<8xf32> to vector<8x1xf32>
      %c0_11 = arith.constant 0 : index
      %c0_12 = arith.constant 0 : index
      %25 = vector.load %arg4[%c0_11, %c0_12] : memref<8x1xf32, #tpu.memory_space<vmem>>, vector<8x1xf32>
      tpu.vector_store %arg4[%c0_11, %c0_12], %24 {strides = array<i32>} : memref<8x1xf32, #tpu.memory_space<vmem>>, vector<8x1xf32>,
    } else {
    }
    %cst_4 = arith.constant 1.000000e+00 : f32
    %10 = arith.divf %cst_4, %0 : f32
    %c0_5 = arith.constant 0 : index
    %c0_6 = arith.constant 0 : index
    %11 = vector.load %arg4[%c0_5, %c0_6] : memref<8x1xf32, #tpu.memory_space<vmem>>, vector<8x1xf32>
    %12 = math.log %11 : vector<8x1xf32>
    %cst_7 = arith.constant 5.54517746 : f32
    %13 = vector.broadcast %cst_7 : f32 to vector<8x1xf32>
    %14 = arith.subf %12, %13 : vector<8x1xf32>
    %15 = vector.broadcast %10 : f32 to vector<8x1xf32>
    %16 = arith.mulf %14, %15 : vector<8x1xf32>
    %17 = math.exp %16 : vector<8x1xf32>
    %c0_8 = arith.constant 0 : index
    %c0_9 = arith.constant 0 : index
    %18 = vector.load %arg3[%c0_8, %c0_9] : memref<8x1xf32, #tpu.memory_space<vmem>>, vector<8x1xf32>
    tpu.vector_store %arg3[%c0_8, %c0_9], %17 {strides = array<i32>} : memref<8x1xf32, #tpu.memory_space<vmem>>, vector<8x1xf32>,
    return
  }
  func.func @transform_0(%arg0: i32) -> i32 {
    %c0_i32 = arith.constant 0 : i32
    %c0_i32_0 = arith.constant 0 : i32
    return %c0_i32 : i32
  }
  func.func @transform_1(%arg0: i32) -> (i32, i32) {
    %c0_i32 = arith.constant 0 : i32
    %c0_i32_0 = arith.constant 0 : i32
    return %arg0, %c0_i32 : i32, i32
  }
  func.func @transform_2(%arg0: i32) -> (i32, i32) {
    %c0_i32 = arith.constant 0 : i32
    %c0_i32_0 = arith.constant 0 : i32
    return %arg0, %c0_i32 : i32, i32
  }
}

</mosaic_0001>

<llo_original>
// kernel: gem_forward.1
$region0: #{gem_forward.1}
  #allocation0 [shape = 'u32[]', space=smem, size = 0x4, offset = 0x4, fixed_abs, tag = 'smem constant byte address 0x4 - core index']
  #allocation1 [shape = 'u32[144,128]{1,0:T(1,128)}', space=vmem, size = 0x12000, scoped, tag = 'internal scratch']
  #allocation2 [shape = 'f32[8,1]{1,0:T(8,128)}', space=vmem, size = 0x1000, scoped, tag = 'scratch operand']
  #allocation3 [shape = 'f32[1]{0:T(128)S(6)}', space=smem, size = 0x200, scoped, tag = 'scoped memory for gem_forward.1']
  %s0 = inlined_call_operand.<no memory space> [shape: f32[1], index: 0, kind: input, shape index: {}]
  %s1 = inlined_call_operand.vmem [shape: f32[8,256], index: 1, kind: input, shape index: {}]
  %s2 = inlined_call_operand.vmem [shape: f32[8,1], index: 2, kind: output, shape index: {}]
  %s3 = sld [smem:[#allocation0]]
  $region26: #{gem_forward.1} parent=0
    _
  %s5 = ssub.s32 1, %s3
  %s6 = scalar_select 0, %s5, %s3
  %7 = sst [smem:[#allocation3]] %s0
  // Predicated region
  $region2: #{gem_forward.1} parent=0 // pred_check
    _
  $region3: #{gem_forward.1} parent=0 // pred_check_branch
    %9 = sbr.rel (0) target = $region5
  $region4: #{gem_forward.1} parent=0 // pred_region
    _
  $region5: #{gem_forward.1} parent=0 // pred_fallthru
    _
  // Predicated region
  $region6: #{gem_forward.1} parent=0 // pred_check
    _
  $region7: #{gem_forward.1} parent=0 // pred_check_branch
    %11 = sbr.rel (0) target = $region9
  $region8: #{gem_forward.1} parent=0 // pred_region
    _
  $region9: #{gem_forward.1} parent=0 // pred_fallthru
    _
  %s12 = sld [smem:[#allocation3]]
  %v13 = vld [vmem:[%s1] sm:$0xff]
  %v14 = vld [vmem:[%s1 + $0x8] sm:$0xff]
  %v15 = vmax.f32 %v13, 1e-06
  %v16 = vmax.f32 %v14, 1e-06
  %p17 = scmp.eq.f32.partialorder %s12, 3.0
  // Predicated region
  $region10: #{gem_forward.1} parent=0 // pred_check
    %p18 = pneg %p17
  $region11: #{gem_forward.1} parent=0 // pred_check_branch
    %20 = sbr.rel (%p18) target = $region13
  $region12: #{gem_forward.1} parent=0 // pred_region
    %v21 = vmul.f32 %v15, %v15
    %v22 = vmul.f32 %v16, %v16
    %v23 = vmul.f32 %v21, %v15
    %v24 = vmul.f32 %v22, %v16
    %v25 = vadd.f32 %v23, %v24
    %26 = vadd.xlane.f32.xlu0 %v25
    %v27 = vpop.xlane.xlu0 %26
    %vm28 = vcmask 7168
    %29 = vst.msk [vmem:[#allocation2] sm:$0xff] %vm28, %v27
  $region13: #{gem_forward.1} parent=0 // pred_fallthru
    _
  %p30 = pneg %p17
  // Predicated region
  $region14: #{gem_forward.1} parent=0 // pred_check
    _
  $region15: #{gem_forward.1} parent=0 // pred_check_branch
    %32 = sbr.rel (%p17) target = $region17
  $region16: #{gem_forward.1} parent=0 // pred_region
    %v33 = vlog2.pop %v15
    %v34 = vmul.f32 %v33, 0.6931472
    %v35 = vlog2.pop %v16
    %v36 = vmul.f32 %v35, 0.6931472
    %v37 = vstv %s12
    %v38 = vmul.f32 %v34, %v37
    %v39 = vmul.f32 %v36, %v37
    %v40 = vmul.f32 %v38, 1.442695
    %v41 = vpow.pop %v40
    %v42 = vmul.f32 %v39, 1.442695
    %v43 = vpow.pop %v42
    %v44 = vadd.f32 %v41, %v43
    %45 = vadd.xlane.f32.xlu0 %v44
    %v46 = vpop.xlane.xlu0 %45
    %vm47 = vcmask 7168
    %48 = vst.msk [vmem:[#allocation2] sm:$0xff] %vm47, %v46
  $region17: #{gem_forward.1} parent=0 // pred_fallthru
    _
  %v49 = vstv %s12
  %v50 = vrcp.pop %v49
  %s51 = vtos %v50
  %v52 = vld [vmem:[#allocation2] sm:$0xff]
  %v53 = vlog2.pop %v52
  %v54 = vmul.f32 %v53, 0.6931472
  %v55 = vsub.f32 %v54, 5.5451775
  %v56 = vstv %s51
  %v57 = vmul.f32 %v55, %v56
  %v58 = vmul.f32 %v57, 1.442695
  %v59 = vpow.pop %v58
  %vm60 = vcmask 7168
  %61 = vst.msk [vmem:[%s2] sm:$0xff] %vm60, %v59
  // Predicated region
  $region18: #{gem_forward.1} parent=0 // pred_check
    _
  $region19: #{gem_forward.1} parent=0 // pred_check_branch
    %63 = sbr.rel (0) target = $region21
  $region20: #{gem_forward.1} parent=0 // pred_region
    _
  $region21: #{gem_forward.1} parent=0 // pred_fallthru
    _
  // Predicated region
  $region22: #{gem_forward.1} parent=0 // pred_check
    _
  $region23: #{gem_forward.1} parent=0 // pred_check_branch
    %65 = sbr.rel (0) target = $region25
  $region24: #{gem_forward.1} parent=0 // pred_region
    _
  $region25: #{gem_forward.1} parent=0 // pred_fallthru
    _

</llo_original>
